<compile_context>
chip_gen: v5e
topology: v5e:2x2
jax: 0.10.0
libtpu: 0.0.40
codegen_flags: <defaults>
</compile_context>

<pallas_src>
import jax
import jax.numpy as jnp
from jax.experimental import pallas as pl
from jax.experimental.pallas import tpu as pltpu

HIDDEN = 128  # fixed by the module definition


def ae_kernel(x_ref, w1_ref, b1_ref, w2_ref, b2_ref,
              w3_ref, b3_ref, w4_ref, b4_ref, o_ref):
    """Fused 4x (bf16 matmul -> f32 bias add -> ReLU) on one batch tile."""
    h = x_ref[...]  # already bf16 from the wrapper; no extra cast pass

    a = jnp.dot(h, w1_ref[...], preferred_element_type=jnp.float32) + b1_ref[...]
    h = jnp.maximum(a, 0.0).astype(jnp.bfloat16)        # relu(encoder_hidden_layer)

    a = jnp.dot(h, w2_ref[...], preferred_element_type=jnp.float32) + b2_ref[...]
    h = jnp.maximum(a, 0.0).astype(jnp.bfloat16)        # relu(encoder_output_layer)

    a = jnp.dot(h, w3_ref[...], preferred_element_type=jnp.float32) + b3_ref[...]
    h = jnp.maximum(a, 0.0).astype(jnp.bfloat16)        # relu(decoder_hidden_layer)

    a = jnp.dot(h, w4_ref[...], preferred_element_type=jnp.float32) + b4_ref[...]
    # The original module applies ReLU to the decoder output layer as well.
    o_ref[...] = jnp.maximum(a, 0.0).astype(o_ref.dtype)


def _pick_tile_b(B):
    if B <= 8:
        return B
    # Cap at 256 rows (fills MXU M on v5e/v6e/v7x) and aim for >= 2 grid steps
    # so both v7x TensorCores get work; keep a multiple of 8 sublanes.
    return min(256, 8 * pl.cdiv(B, 16))


def ae_forward(x, params, *, tile_b=None):
    """x: (B, D) float. params: w{i} as (in, out), b{i} as (1, out)."""
    B, D = x.shape
    assert params["w1"].shape[0] == D and params["w4"].shape[1] == D

    if tile_b is None:
        tile_b = _pick_tile_b(B)

    Bp = tile_b * pl.cdiv(B, tile_b)          # pad batch to a tile multiple
    Dp = 128 * pl.cdiv(D, 128)                # pad features to lane multiple
    assert tile_b == Bp or tile_b % 8 == 0

    # bf16 operands for the MXU; f32 accumulate/bias/ReLU inside the kernel.
    xb = x.astype(jnp.bfloat16)
    w1 = params["w1"].astype(jnp.bfloat16)
    w2 = params["w2"].astype(jnp.bfloat16)
    w3 = params["w3"].astype(jnp.bfloat16)
    w4 = params["w4"].astype(jnp.bfloat16)
    b1 = params["b1"].astype(jnp.float32)
    b2 = params["b2"].astype(jnp.float32)
    b3 = params["b3"].astype(jnp.float32)
    b4 = params["b4"].astype(jnp.float32)

    if Bp != B or Dp != D:
        xb = jnp.pad(xb, ((0, Bp - B), (0, Dp - D)))
    if Dp != D:
        w1 = jnp.pad(w1, ((0, Dp - D), (0, 0)))
        w4 = jnp.pad(w4, ((0, 0), (0, Dp - D)))
        b4 = jnp.pad(b4, ((0, 0), (0, Dp - D)))

    grid = (Bp // tile_b,)

    def whole(arr):
        # Weights/biases (all 2D, small): whole tensor, constant block index.
        return pl.BlockSpec(arr.shape, lambda i: (0, 0))

    flops = 2 * Bp * (Dp * HIDDEN + HIDDEN * HIDDEN + HIDDEN * HIDDEN + HIDDEN * Dp)
    bytes_accessed = (
        Bp * Dp * 2                                               # x (bf16)
        + Bp * Dp * 4                                             # out (f32)
        + (Dp * HIDDEN + 2 * HIDDEN * HIDDEN + HIDDEN * Dp) * 2   # weights (bf16)
        + (3 * HIDDEN + Dp) * 4                                   # biases (f32)
    )

    out = pl.pallas_call(
        ae_kernel,
        out_shape=jax.ShapeDtypeStruct((Bp, Dp), jnp.float32),
        grid_spec=pl.GridSpec(
            grid=grid,
            in_specs=[
                pl.BlockSpec((tile_b, Dp), lambda i: (i, 0)),     # x tile
                whole(w1), whole(b1),
                whole(w2), whole(b2),
                whole(w3), whole(b3),
                whole(w4), whole(b4),
            ],
            out_specs=pl.BlockSpec((tile_b, Dp), lambda i: (i, 0)),
        ),
        compiler_params=pltpu.CompilerParams(
            dimension_semantics=("parallel",),
            vmem_limit_bytes=32 * 1024 * 1024,
        ),
        cost_estimate=pl.CostEstimate(
            flops=flops, transcendentals=0, bytes_accessed=bytes_accessed),
    )(xb, w1, b1, w2, b2, w3, b3, w4, b4)

    if Bp != B or Dp != D:
        out = out[:B, :D]
    return out.astype(x.dtype)


def init_params(key, input_shape):
    """Mimics nn.Linear's U(-1/sqrt(fan_in), 1/sqrt(fan_in)); weights stored (in, out)."""
    dims = [(input_shape, HIDDEN), (HIDDEN, HIDDEN), (HIDDEN, HIDDEN), (HIDDEN, input_shape)]
    params = {}
    for idx, (fan_in, fan_out) in enumerate(dims, start=1):
        key, kw, kb = jax.random.split(key, 3)
        bound = 1.0 / (fan_in ** 0.5)
        params[f"w{idx}"] = jax.random.uniform(
            kw, (fan_in, fan_out), jnp.float32, -bound, bound).astype(jnp.bfloat16)
        params[f"b{idx}"] = jax.random.uniform(
            kb, (1, fan_out), jnp.float32, -bound, bound)
    return params


def ae_forward_ref(x, params):
    """Pure-JAX reference using the same bf16-operand / f32-accumulate math."""
    h = x.astype(jnp.float32)
    for i in range(1, 5):
        a = jnp.dot(h.astype(jnp.bfloat16), params[f"w{i}"].astype(jnp.bfloat16),
                    preferred_element_type=jnp.float32) + params[f"b{i}"].astype(jnp.float32)
        h = jnp.maximum(a, 0.0)
    return h


if __name__ == "__main__":
    key = jax.random.PRNGKey(0)
    k_x, k_p, k_x2 = jax.random.split(key, 3)

    # Main test: multi-step "parallel" grid (tile_b=16 -> grid=(2,)), lane-dense D.
    B, D = 32, 256
    x = jax.random.normal(k_x, (B, D), jnp.float32)
    params = init_params(k_p, D)

    out = jax.block_until_ready(ae_forward(x, params))
    ref = ae_forward_ref(x, params)
    assert out.shape == (B, D)
    assert jnp.allclose(out, ref, atol=1e-3, rtol=1e-3), float(jnp.max(jnp.abs(out - ref)))

    # Ragged test: exercises batch/feature padding in the wrapper.
    B2, D2 = 5, 200
    x2 = jax.random.normal(k_x2, (B2, D2), jnp.float32)
    params2 = init_params(k_p, D2)
    out2 = jax.block_until_ready(ae_forward(x2, params2))
    ref2 = ae_forward_ref(x2, params2)
    assert out2.shape == (B2, D2)
    assert jnp.allclose(out2, ref2, atol=1e-3, rtol=1e-3), float(jnp.max(jnp.abs(out2 - ref2)))

    print("KERNEL_OK")
</pallas_src>

<mosaic_0001>
module attributes {stable_mosaic.version = 11 : i64} {
  func.func @ae_kernel(%arg0: i32, %arg1: memref<16x256xbf16, #tpu.memory_space<vmem>>, %arg2: memref<256x128xbf16, #tpu.memory_space<vmem>>, %arg3: memref<1x128xf32, #tpu.memory_space<vmem>>, %arg4: memref<128x128xbf16, #tpu.memory_space<vmem>>, %arg5: memref<1x128xf32, #tpu.memory_space<vmem>>, %arg6: memref<128x128xbf16, #tpu.memory_space<vmem>>, %arg7: memref<1x128xf32, #tpu.memory_space<vmem>>, %arg8: memref<128x256xbf16, #tpu.memory_space<vmem>>, %arg9: memref<1x256xf32, #tpu.memory_space<vmem>>, %arg10: memref<16x256xf32, #tpu.memory_space<vmem>>) attributes {dimension_semantics = [#tpu.dimension_semantics<parallel>], iteration_bounds = array<i64: 2>, scalar_prefetch = 0 : i64, scratch_operands = 0 : i64, tpu.core_type = #tpu.core_type<tc>, window_params = [{transform_indices = @transform_0, window_bounds = array<i64: 16, 256>}, {pipeline_mode = #tpu.pipeline_mode<synchronous>, transform_indices = @transform_1, window_bounds = array<i64: 256, 128>}, {pipeline_mode = #tpu.pipeline_mode<synchronous>, transform_indices = @transform_2, window_bounds = array<i64: 1, 128>}, {pipeline_mode = #tpu.pipeline_mode<synchronous>, transform_indices = @transform_3, window_bounds = array<i64: 128, 128>}, {pipeline_mode = #tpu.pipeline_mode<synchronous>, transform_indices = @transform_4, window_bounds = array<i64: 1, 128>}, {pipeline_mode = #tpu.pipeline_mode<synchronous>, transform_indices = @transform_5, window_bounds = array<i64: 128, 128>}, {pipeline_mode = #tpu.pipeline_mode<synchronous>, transform_indices = @transform_6, window_bounds = array<i64: 1, 128>}, {pipeline_mode = #tpu.pipeline_mode<synchronous>, transform_indices = @transform_7, window_bounds = array<i64: 128, 256>}, {pipeline_mode = #tpu.pipeline_mode<synchronous>, transform_indices = @transform_8, window_bounds = array<i64: 1, 256>}, {transform_indices = @transform_9, window_bounds = array<i64: 16, 256>}]} {
    %c0 = arith.constant 0 : index
    %c0_0 = arith.constant 0 : index
    %0 = vector.load %arg1[%c0, %c0_0] : memref<16x256xbf16, #tpu.memory_space<vmem>>, vector<16x256xbf16>
    %c0_1 = arith.constant 0 : index
    %c0_2 = arith.constant 0 : index
    %1 = vector.load %arg2[%c0_1, %c0_2] : memref<256x128xbf16, #tpu.memory_space<vmem>>, vector<256x128xbf16>
    %cst = arith.constant dense<0.000000e+00> : vector<16x128xf32>
    %2 = tpu.matmul %0, %1, %cst {dimension_numbers = #tpu.dot_dimension_numbers<[1], [0], [0], [1], [0, 0, 1, 1], [], []>} : vector<16x256xbf16>, vector<256x128xbf16>, vector<16x128xf32> -> vector<16x128xf32>
    %c0_3 = arith.constant 0 : index
    %c0_4 = arith.constant 0 : index
    %3 = vector.load %arg3[%c0_3, %c0_4] : memref<1x128xf32, #tpu.memory_space<vmem>>, vector<1x128xf32>
    %4 = vector.broadcast %3 : vector<1x128xf32> to vector<16x128xf32>
    %5 = arith.addf %2, %4 : vector<16x128xf32>
    %cst_5 = arith.constant 0.000000e+00 : f32
    %6 = vector.broadcast %cst_5 : f32 to vector<16x128xf32>
    %7 = arith.maximumf %5, %6 : vector<16x128xf32>
    %8 = arith.truncf %7 : vector<16x128xf32> to vector<16x128xbf16>
    %c0_6 = arith.constant 0 : index
    %c0_7 = arith.constant 0 : index
    %9 = vector.load %arg4[%c0_6, %c0_7] : memref<128x128xbf16, #tpu.memory_space<vmem>>, vector<128x128xbf16>
    %cst_8 = arith.constant dense<0.000000e+00> : vector<16x128xf32>
    %10 = tpu.matmul %8, %9, %cst_8 {dimension_numbers = #tpu.dot_dimension_numbers<[1], [0], [0], [1], [0, 0, 1, 1], [], []>} : vector<16x128xbf16>, vector<128x128xbf16>, vector<16x128xf32> -> vector<16x128xf32>
    %c0_9 = arith.constant 0 : index
    %c0_10 = arith.constant 0 : index
    %11 = vector.load %arg5[%c0_9, %c0_10] : memref<1x128xf32, #tpu.memory_space<vmem>>, vector<1x128xf32>
    %12 = vector.broadcast %11 : vector<1x128xf32> to vector<16x128xf32>
    %13 = arith.addf %10, %12 : vector<16x128xf32>
    %cst_11 = arith.constant 0.000000e+00 : f32
    %14 = vector.broadcast %cst_11 : f32 to vector<16x128xf32>
    %15 = arith.maximumf %13, %14 : vector<16x128xf32>
    %16 = arith.truncf %15 : vector<16x128xf32> to vector<16x128xbf16>
    %c0_12 = arith.constant 0 : index
    %c0_13 = arith.constant 0 : index
    %17 = vector.load %arg6[%c0_12, %c0_13] : memref<128x128xbf16, #tpu.memory_space<vmem>>, vector<128x128xbf16>
    %cst_14 = arith.constant dense<0.000000e+00> : vector<16x128xf32>
    %18 = tpu.matmul %16, %17, %cst_14 {dimension_numbers = #tpu.dot_dimension_numbers<[1], [0], [0], [1], [0, 0, 1, 1], [], []>} : vector<16x128xbf16>, vector<128x128xbf16>, vector<16x128xf32> -> vector<16x128xf32>
    %c0_15 = arith.constant 0 : index
    %c0_16 = arith.constant 0 : index
    %19 = vector.load %arg7[%c0_15, %c0_16] : memref<1x128xf32, #tpu.memory_space<vmem>>, vector<1x128xf32>
    %20 = vector.broadcast %19 : vector<1x128xf32> to vector<16x128xf32>
    %21 = arith.addf %18, %20 : vector<16x128xf32>
    %cst_17 = arith.constant 0.000000e+00 : f32
    %22 = vector.broadcast %cst_17 : f32 to vector<16x128xf32>
    %23 = arith.maximumf %21, %22 : vector<16x128xf32>
    %24 = arith.truncf %23 : vector<16x128xf32> to vector<16x128xbf16>
    %c0_18 = arith.constant 0 : index
    %c0_19 = arith.constant 0 : index
    %25 = vector.load %arg8[%c0_18, %c0_19] : memref<128x256xbf16, #tpu.memory_space<vmem>>, vector<128x256xbf16>
    %cst_20 = arith.constant dense<0.000000e+00> : vector<16x256xf32>
    %26 = tpu.matmul %24, %25, %cst_20 {dimension_numbers = #tpu.dot_dimension_numbers<[1], [0], [0], [1], [0, 0, 1, 1], [], []>} : vector<16x128xbf16>, vector<128x256xbf16>, vector<16x256xf32> -> vector<16x256xf32>
    %c0_21 = arith.constant 0 : index
    %c0_22 = arith.constant 0 : index
    %27 = vector.load %arg9[%c0_21, %c0_22] : memref<1x256xf32, #tpu.memory_space<vmem>>, vector<1x256xf32>
    %28 = vector.broadcast %27 : vector<1x256xf32> to vector<16x256xf32>
    %29 = arith.addf %26, %28 : vector<16x256xf32>
    %cst_23 = arith.constant 0.000000e+00 : f32
    %30 = vector.broadcast %cst_23 : f32 to vector<16x256xf32>
    %31 = arith.maximumf %29, %30 : vector<16x256xf32>
    %c0_24 = arith.constant 0 : index
    %c0_25 = arith.constant 0 : index
    %32 = vector.load %arg10[%c0_24, %c0_25] : memref<16x256xf32, #tpu.memory_space<vmem>>, vector<16x256xf32>
    tpu.vector_store %arg10[%c0_24, %c0_25], %31 {strides = array<i32>} : memref<16x256xf32, #tpu.memory_space<vmem>>, vector<16x256xf32>,
    return
  }
  func.func @transform_0(%arg0: i32) -> (i32, i32) {
    %c0_i32 = arith.constant 0 : i32
    %c0_i32_0 = arith.constant 0 : i32
    return %arg0, %c0_i32 : i32, i32
  }
  func.func @transform_1(%arg0: i32) -> (i32, i32) {
    %c0_i32 = arith.constant 0 : i32
    %c0_i32_0 = arith.constant 0 : i32
    %c0_i32_1 = arith.constant 0 : i32
    return %c0_i32, %c0_i32_0 : i32, i32
  }
  func.func @transform_2(%arg0: i32) -> (i32, i32) {
    %c0_i32 = arith.constant 0 : i32
    %c0_i32_0 = arith.constant 0 : i32
    %c0_i32_1 = arith.constant 0 : i32
    return %c0_i32, %c0_i32_0 : i32, i32
  }
  func.func @transform_3(%arg0: i32) -> (i32, i32) {
    %c0_i32 = arith.constant 0 : i32
    %c0_i32_0 = arith.constant 0 : i32
    %c0_i32_1 = arith.constant 0 : i32
    return %c0_i32, %c0_i32_0 : i32, i32
  }
  func.func @transform_4(%arg0: i32) -> (i32, i32) {
    %c0_i32 = arith.constant 0 : i32
    %c0_i32_0 = arith.constant 0 : i32
    %c0_i32_1 = arith.constant 0 : i32
    return %c0_i32, %c0_i32_0 : i32, i32
  }
  func.func @transform_5(%arg0: i32) -> (i32, i32) {
    %c0_i32 = arith.constant 0 : i32
    %c0_i32_0 = arith.constant 0 : i32
    %c0_i32_1 = arith.constant 0 : i32
    return %c0_i32, %c0_i32_0 : i32, i32
  }
  func.func @transform_6(%arg0: i32) -> (i32, i32) {
    %c0_i32 = arith.constant 0 : i32
    %c0_i32_0 = arith.constant 0 : i32
    %c0_i32_1 = arith.constant 0 : i32
    return %c0_i32, %c0_i32_0 : i32, i32
  }
  func.func @transform_7(%arg0: i32) -> (i32, i32) {
    %c0_i32 = arith.constant 0 : i32
    %c0_i32_0 = arith.constant 0 : i32
    %c0_i32_1 = arith.constant 0 : i32
    return %c0_i32, %c0_i32_0 : i32, i32
  }
  func.func @transform_8(%arg0: i32) -> (i32, i32) {
    %c0_i32 = arith.constant 0 : i32
    %c0_i32_0 = arith.constant 0 : i32
    %c0_i32_1 = arith.constant 0 : i32
    return %c0_i32, %c0_i32_0 : i32, i32
  }
  func.func @transform_9(%arg0: i32) -> (i32, i32) {
    %c0_i32 = arith.constant 0 : i32
    %c0_i32_0 = arith.constant 0 : i32
    return %arg0, %c0_i32 : i32, i32
  }
}

</mosaic_0001>

<llo_original>
// kernel: tpu_custom_call.1
$region0: #{tpu_custom_call.1}
  #allocation0 [shape = 'u32[]', space=smem, size = 0x4, offset = 0x4, fixed_abs, tag = 'smem constant byte address 0x4 - core index']
  #allocation1 [shape = 'u32[72,128]{1,0:T(1,128)}', space=vmem, size = 0x9000, scoped, tag = 'internal scratch']
  %s0 = inlined_call_operand.hbm [shape: bf16[32,256], index: 0, kind: input, shape index: {}]
  %s1 = inlined_call_operand.hbm [shape: bf16[256,128], index: 1, kind: input, shape index: {}]
  %s2 = inlined_call_operand.vmem [shape: f32[1,128], index: 2, kind: input, shape index: {}]
  %s3 = inlined_call_operand.hbm [shape: bf16[128,128], index: 3, kind: input, shape index: {}]
  %s4 = inlined_call_operand.hbm [shape: f32[1,128], index: 4, kind: input, shape index: {}]
  %s5 = inlined_call_operand.hbm [shape: bf16[128,128], index: 5, kind: input, shape index: {}]
  %s6 = inlined_call_operand.vmem [shape: f32[1,128], index: 6, kind: input, shape index: {}]
  %s7 = inlined_call_operand.hbm [shape: bf16[128,256], index: 7, kind: input, shape index: {}]
  %s8 = inlined_call_operand.vmem [shape: f32[1,256], index: 8, kind: input, shape index: {}]
  %s9 = inlined_call_operand.hbm [shape: f32[32,256], index: 9, kind: output, shape index: {}]
  %s10 = sld [smem:[#allocation0]]
  $region93: #{tpu_custom_call.1} parent=0
    _
  %s12 = ssub.s32 1, %s10
  %s13 = scalar_select 0, %s12, %s10
  $region1: #{tpu_custom_call.1} parent=0
    #allocation2 [shape = 'u8[16384]{0}', space=vmem, size = 0x4000, scoped, tag = 'input window, operand 0']
    #allocation3 [shape = 's32[2]{0}', space=sflag, size = 0x8, scoped, tag = 'scoped memory for tpu_custom_call.1']
    #allocation4 [shape = 's32[2]{0}', space=sflag, size = 0x8, scoped, tag = 'scoped memory for tpu_custom_call.1']
    #allocation5 [shape = 'u8[65536]{0}', space=vmem, size = 0x10000, scoped, tag = 'input window, operand 1, single buffered']
    #allocation6 [shape = 's32[1]{0}', space=sflag, size = 0x4, scoped, tag = 'scoped memory for tpu_custom_call.1']
    #allocation7 [shape = 'u8[32768]{0}', space=vmem, size = 0x8000, scoped, tag = 'input window, operand 3, single buffered']
    #allocation8 [shape = 'u8[512]{0}', space=vmem, size = 0x400, scoped, tag = 'input window, operand 4, single buffered']
    #allocation9 [shape = 's32[1]{0}', space=sflag, size = 0x4, scoped, tag = 'scoped memory for tpu_custom_call.1']
    #allocation10 [shape = 'u8[32768]{0}', space=vmem, size = 0x8000, scoped, tag = 'input window, operand 5, single buffered']
    #allocation11 [shape = 'u8[65536]{0}', space=vmem, size = 0x10000, scoped, tag = 'input window, operand 7, single buffered']
    #allocation12 [shape = 's32[1]{0}', space=sflag, size = 0x4, scoped, tag = 'scoped memory for tpu_custom_call.1']
    #allocation13 [shape = 'u8[32768]{0}', space=vmem, size = 0x8000, scoped, tag = 'output window, operand 0']
    %14 = vsyncpa [#allocation3], 0
    %s15 = scalar_lea.sflag [#allocation3], 1
    %16 = vsyncpa %s15, 0
    %17 = vsyncpa [#allocation6], 0
    %18 = vsyncpa [#allocation9], 0
    %19 = vsyncpa [#allocation12], 0
    %20 = vsyncpa [#allocation4], 0
    %s21 = scalar_lea.sflag [#allocation4], 1
    %22 = vsyncpa %s21, 0
    loop: start=0, step=1, limit=4
    $region2: #{tpu_custom_call.1} parent=1 // loop_pre_header
      _
    $region3: #{tpu_custom_call.1} parent=1 // loop_header
      %s24 = sphi 0, %s28
      %p25 = scmp.ge.s32.totalorder %s24, 4
      %s34 = sphi 0, %s36
      %s37 = sphi 0, %s34
      %s38 = sphi 0, %s37
      %s54 = sphi 0, %s38
      %s58 = sphi 0, %s58
      %s60 = sphi 0, %s58
      %s61 = sphi 0, %s60
      %s75 = sphi 0, %s61
      %s79 = sphi 0, %s79
      %s81 = sphi 0, %s79
      %s82 = sphi 0, %s81
      %s96 = sphi 0, %s82
      %s100 = sphi 0, %s100
      %s102 = sphi 0, %s100
      %s103 = sphi 0, %s102
      %s117 = sphi 0, %s103
      %s121 = sphi 0, %s121
      %s123 = sphi 0, %s121
      %s124 = sphi 0, %s123
      %s138 = sphi 0, %s124
      %s142 = sphi 0, %s142
      %s144 = sphi 0, %s142
      %s145 = sphi 0, %s144
      %s159 = sphi 0, %s145
      %s163 = sphi 0, %s163
      %s165 = sphi 0, %s163
      %s166 = sphi 0, %s165
      %s180 = sphi 0, %s166
      %s184 = sphi 0, %s184
      %s186 = sphi 0, %s184
      %s187 = sphi 0, %s186
      %s201 = sphi 0, %s187
      %s205 = sphi 0, %s205
      %s207 = sphi 0, %s205
      %s208 = sphi 0, %s207
      %s222 = sphi 0, %s208
      %s228 = sphi 0, %s230
      %s231 = sphi 0, %s228
      %s232 = sphi 0, %s231
      %s248 = sphi 0, %s232
    $region4: #{tpu_custom_call.1} parent=1 // loop_header_branch
      %27 = sbr.rel (%p25) target = $region8
    $region5: #{tpu_custom_call.1} parent=1 // loop_body
      %s29 = ssub.s32 %s24, 1
      %s30 = ssub.s32 %s24, 2
      %s31 = sadd.s32 %s24, 1
      %s32 = ssub.s32 %s24, %s31
      %p33 = scmp.eq.s32.totalorder %s32, 0
      %s35 = sadd.s32 %s34, 1
      %s36 = scalar_select %p33, %s34, %s35
      %p39 = pneg %p33
      %p40 = scmp.eq.s32.totalorder %s24, 1
      %p41 = por %p39, %p40
      %p42 = scmp.ne.s32.totalorder %s34, %s37
      %p43 = scmp.eq.s32.totalorder %s24, 0
      %p44 = por %p42, %p43
      %p45 = scmp.ne.s32.totalorder %s34, %s37
      %p46 = scmp.eq.s32.totalorder %s29, 1
      %p47 = por %p45, %p46
      %p48 = scmp.ne.s32.totalorder %s37, %s38
      %p49 = scmp.eq.s32.totalorder %s29, 0
      %p50 = por %p48, %p49
      %p51 = scmp.ne.s32.totalorder %s37, %s38
      %p52 = scmp.eq.s32.totalorder %s30, 1
      %p53 = por %p51, %p52
      %p55 = scmp.ne.s32.totalorder %s38, %s54
      %p56 = scmp.eq.s32.totalorder %s30, 0
      %p57 = por %p55, %p56
      %s59 = sadd.s32 %s58, 1
      %p62 = scmp.eq.s32.totalorder %s24, 1
      %p63 = scmp.ne.s32.totalorder %s58, %s60
      %p64 = scmp.eq.s32.totalorder %s24, 0
      %p65 = por %p63, %p64
      %p66 = scmp.ne.s32.totalorder %s58, %s60
      %p67 = scmp.eq.s32.totalorder %s29, 1
      %p68 = por %p66, %p67
      %p69 = scmp.ne.s32.totalorder %s60, %s61
      %p70 = scmp.eq.s32.totalorder %s29, 0
      %p71 = por %p69, %p70
      %p72 = scmp.ne.s32.totalorder %s60, %s61
      %p73 = scmp.eq.s32.totalorder %s30, 1
      %p74 = por %p72, %p73
      %p76 = scmp.ne.s32.totalorder %s61, %s75
      %p77 = scmp.eq.s32.totalorder %s30, 0
      %p78 = por %p76, %p77
      %s80 = sadd.s32 %s79, 1
      %p83 = scmp.eq.s32.totalorder %s24, 1
      %p84 = scmp.ne.s32.totalorder %s79, %s81
      %p85 = scmp.eq.s32.totalorder %s24, 0
      %p86 = por %p84, %p85
      %p87 = scmp.ne.s32.totalorder %s79, %s81
      %p88 = scmp.eq.s32.totalorder %s29, 1
      %p89 = por %p87, %p88
      %p90 = scmp.ne.s32.totalorder %s81, %s82
      %p91 = scmp.eq.s32.totalorder %s29, 0
      %p92 = por %p90, %p91
      %p93 = scmp.ne.s32.totalorder %s81, %s82
      %p94 = scmp.eq.s32.totalorder %s30, 1
      %p95 = por %p93, %p94
      %p97 = scmp.ne.s32.totalorder %s82, %s96
      %p98 = scmp.eq.s32.totalorder %s30, 0
      %p99 = por %p97, %p98
      %s101 = sadd.s32 %s100, 1
      %p104 = scmp.eq.s32.totalorder %s24, 1
      %p105 = scmp.ne.s32.totalorder %s100, %s102
      %p106 = scmp.eq.s32.totalorder %s24, 0
      %p107 = por %p105, %p106
      %p108 = scmp.ne.s32.totalorder %s100, %s102
      %p109 = scmp.eq.s32.totalorder %s29, 1
      %p110 = por %p108, %p109
      %p111 = scmp.ne.s32.totalorder %s102, %s103
      %p112 = scmp.eq.s32.totalorder %s29, 0
      %p113 = por %p111, %p112
      %p114 = scmp.ne.s32.totalorder %s102, %s103
      %p115 = scmp.eq.s32.totalorder %s30, 1
      %p116 = por %p114, %p115
      %p118 = scmp.ne.s32.totalorder %s103, %s117
      %p119 = scmp.eq.s32.totalorder %s30, 0
      %p120 = por %p118, %p119
      %s122 = sadd.s32 %s121, 1
      %p125 = scmp.eq.s32.totalorder %s24, 1
      %p126 = scmp.ne.s32.totalorder %s121, %s123
      %p127 = scmp.eq.s32.totalorder %s24, 0
      %p128 = por %p126, %p127
      %p129 = scmp.ne.s32.totalorder %s121, %s123
      %p130 = scmp.eq.s32.totalorder %s29, 1
      %p131 = por %p129, %p130
      %p132 = scmp.ne.s32.totalorder %s123, %s124
      %p133 = scmp.eq.s32.totalorder %s29, 0
      %p134 = por %p132, %p133
      %p135 = scmp.ne.s32.totalorder %s123, %s124
      %p136 = scmp.eq.s32.totalorder %s30, 1
      %p137 = por %p135, %p136
      %p139 = scmp.ne.s32.totalorder %s124, %s138
      %p140 = scmp.eq.s32.totalorder %s30, 0
      %p141 = por %p139, %p140
      %s143 = sadd.s32 %s142, 1
      %p146 = scmp.eq.s32.totalorder %s24, 1
      %p147 = scmp.ne.s32.totalorder %s142, %s144
      %p148 = scmp.eq.s32.totalorder %s24, 0
      %p149 = por %p147, %p148
      %p150 = scmp.ne.s32.totalorder %s142, %s144
      %p151 = scmp.eq.s32.totalorder %s29, 1
      %p152 = por %p150, %p151
      %p153 = scmp.ne.s32.totalorder %s144, %s145
      %p154 = scmp.eq.s32.totalorder %s29, 0
      %p155 = por %p153, %p154
      %p156 = scmp.ne.s32.totalorder %s144, %s145
      %p157 = scmp.eq.s32.totalorder %s30, 1
      %p158 = por %p156, %p157
      %p160 = scmp.ne.s32.totalorder %s145, %s159
      %p161 = scmp.eq.s32.totalorder %s30, 0
      %p162 = por %p160, %p161
      %s164 = sadd.s32 %s163, 1
      %p167 = scmp.eq.s32.totalorder %s24, 1
      %p168 = scmp.ne.s32.totalorder %s163, %s165
      %p169 = scmp.eq.s32.totalorder %s24, 0
      %p170 = por %p168, %p169
      %p171 = scmp.ne.s32.totalorder %s163, %s165
      %p172 = scmp.eq.s32.totalorder %s29, 1
      %p173 = por %p171, %p172
      %p174 = scmp.ne.s32.totalorder %s165, %s166
      %p175 = scmp.eq.s32.totalorder %s29, 0
      %p176 = por %p174, %p175
      %p177 = scmp.ne.s32.totalorder %s165, %s166
      %p178 = scmp.eq.s32.totalorder %s30, 1
      %p179 = por %p177, %p178
      %p181 = scmp.ne.s32.totalorder %s166, %s180
      %p182 = scmp.eq.s32.totalorder %s30, 0
      %p183 = por %p181, %p182
      %s185 = sadd.s32 %s184, 1
      %p188 = scmp.eq.s32.totalorder %s24, 1
      %p189 = scmp.ne.s32.totalorder %s184, %s186
      %p190 = scmp.eq.s32.totalorder %s24, 0
      %p191 = por %p189, %p190
      %p192 = scmp.ne.s32.totalorder %s184, %s186
      %p193 = scmp.eq.s32.totalorder %s29, 1
      %p194 = por %p192, %p193
      %p195 = scmp.ne.s32.totalorder %s186, %s187
      %p196 = scmp.eq.s32.totalorder %s29, 0
      %p197 = por %p195, %p196
      %p198 = scmp.ne.s32.totalorder %s186, %s187
      %p199 = scmp.eq.s32.totalorder %s30, 1
      %p200 = por %p198, %p199
      %p202 = scmp.ne.s32.totalorder %s187, %s201
      %p203 = scmp.eq.s32.totalorder %s30, 0
      %p204 = por %p202, %p203
      %s206 = sadd.s32 %s205, 1
      %p209 = scmp.eq.s32.totalorder %s24, 1
      %p210 = scmp.ne.s32.totalorder %s205, %s207
      %p211 = scmp.eq.s32.totalorder %s24, 0
      %p212 = por %p210, %p211
      %p213 = scmp.ne.s32.totalorder %s205, %s207
      %p214 = scmp.eq.s32.totalorder %s29, 1
      %p215 = por %p213, %p214
      %p216 = scmp.ne.s32.totalorder %s207, %s208
      %p217 = scmp.eq.s32.totalorder %s29, 0
      %p218 = por %p216, %p217
      %p219 = scmp.ne.s32.totalorder %s207, %s208
      %p220 = scmp.eq.s32.totalorder %s30, 1
      %p221 = por %p219, %p220
      %p223 = scmp.ne.s32.totalorder %s208, %s222
      %p224 = scmp.eq.s32.totalorder %s30, 0
      %p225 = por %p223, %p224
      %s226 = ssub.s32 %s24, %s31
      %p227 = scmp.eq.s32.totalorder %s226, 0
      %s229 = sadd.s32 %s228, 1
      %s230 = scalar_select %p227, %s228, %s229
      %p233 = pneg %p227
      %p234 = scmp.eq.s32.totalorder %s24, 1
      %p235 = por %p233, %p234
      %p236 = scmp.ne.s32.totalorder %s228, %s231
      %p237 = scmp.eq.s32.totalorder %s24, 0
      %p238 = por %p236, %p237
      %p239 = scmp.ne.s32.totalorder %s228, %s231
      %p240 = scmp.eq.s32.totalorder %s29, 1
      %p241 = por %p239, %p240
      %p242 = scmp.ne.s32.totalorder %s231, %s232
      %p243 = scmp.eq.s32.totalorder %s29, 0
      %p244 = por %p242, %p243
      %p245 = scmp.ne.s32.totalorder %s231, %s232
      %p246 = scmp.eq.s32.totalorder %s30, 1
      %p247 = por %p245, %p246
      %p249 = scmp.ne.s32.totalorder %s232, %s248
      %p250 = scmp.eq.s32.totalorder %s30, 0
      %p251 = por %p249, %p250
      %p252 = scmp.le.s32.totalorder 1, %s24
      %p253 = scmp.lt.s32.totalorder %s24, 3
      %p254 = pnand %p252, %p253
      %p255 = pneg %p254
      // Predicated region
      $region9: #{tpu_custom_call.1} parent=5 // pred_check
        _
      $region10: #{tpu_custom_call.1} parent=5 // pred_check_branch
        %257 = sbr.rel (%p254) target = $region12
      $region11: #{tpu_custom_call.1} parent=5 // pred_region
        %s258 = ssub.s32 %s24, 1
        // Predicated region
        $region13: #{tpu_custom_call.1} parent=11 // pred_check
          %p259 = pneg %p71
        $region14: #{tpu_custom_call.1} parent=11 // pred_check_branch
          %261 = sbr.rel (%p259) target = $region16
        $region15: #{tpu_custom_call.1} parent=11 // pred_region
          %263 = vsyncadd [#allocation6], 0
          %s264 = sshll.u32 %s1, 4
          %s265 = int_to_ptr.hbm [resolvable:$true] %s264
          %s266 = sshll.u32 [#allocation5], 4
          %s267 = int_to_ptr.vmem [resolvable:$true] %s266
          %272 = dma.hbm_to_vmem [thread:$0]  %s265, 2048, %s267, [#allocation6], 64, 64, 4
        $region16: #{tpu_custom_call.1} parent=11 // pred_fallthru
          _
        // Predicated region
        $region17: #{tpu_custom_call.1} parent=11 // pred_check
          %p273 = pneg %p92
        $region18: #{tpu_custom_call.1} parent=11 // pred_check_branch
          %275 = sbr.rel (%p273) target = $region20
        $region19: #{tpu_custom_call.1} parent=11 // pred_region
          _
        $region20: #{tpu_custom_call.1} parent=11 // pred_fallthru
          _
        // Predicated region
        $region21: #{tpu_custom_call.1} parent=11 // pred_check
          %p276 = pneg %p113
        $region22: #{tpu_custom_call.1} parent=11 // pred_check_branch
          %278 = sbr.rel (%p276) target = $region24
        $region23: #{tpu_custom_call.1} parent=11 // pred_region
          %280 = vsyncadd [#allocation6], 0
          %s281 = sshll.u32 %s3, 4
          %s282 = int_to_ptr.hbm [resolvable:$true] %s281
          %s283 = sshll.u32 [#allocation7], 4
          %s284 = int_to_ptr.vmem [resolvable:$true] %s283
          %289 = dma.hbm_to_vmem [thread:$0]  %s282, 1024, %s284, [#allocation6], 64, 64, 4
        $region24: #{tpu_custom_call.1} parent=11 // pred_fallthru
          _
        // Predicated region
        $region25: #{tpu_custom_call.1} parent=11 // pred_check
          %p290 = pneg %p134
        $region26: #{tpu_custom_call.1} parent=11 // pred_check_branch
          %292 = sbr.rel (%p290) target = $region28
        $region27: #{tpu_custom_call.1} parent=11 // pred_region
          %294 = vsyncadd [#allocation9], 0
          %s296 = sshll.u32 %s4, 4
          %s297 = int_to_ptr.hbm [resolvable:$true] %s296
          %s298 = sshll.u32 [#allocation8], 4
          %s299 = int_to_ptr.vmem [resolvable:$true] %s298
          %301 = dma.hbm_to_vmem [thread:$0]  %s297, 16, %s299, [#allocation9]
        $region28: #{tpu_custom_call.1} parent=11 // pred_fallthru
          _
        // Predicated region
        $region29: #{tpu_custom_call.1} parent=11 // pred_check
          %p302 = pneg %p155
        $region30: #{tpu_custom_call.1} parent=11 // pred_check_branch
          %304 = sbr.rel (%p302) target = $region32
        $region31: #{tpu_custom_call.1} parent=11 // pred_region
          %306 = vsyncadd [#allocation9], 0
          %s307 = sshll.u32 %s5, 4
          %s308 = int_to_ptr.hbm [resolvable:$true] %s307
          %s309 = sshll.u32 [#allocation10], 4
          %s310 = int_to_ptr.vmem [resolvable:$true] %s309
          %315 = dma.hbm_to_vmem [thread:$0]  %s308, 1024, %s310, [#allocation9], 64, 64, 4
        $region32: #{tpu_custom_call.1} parent=11 // pred_fallthru
          _
        // Predicated region
        $region33: #{tpu_custom_call.1} parent=11 // pred_check
          %p316 = pneg %p176
        $region34: #{tpu_custom_call.1} parent=11 // pred_check_branch
          %318 = sbr.rel (%p316) target = $region36
        $region35: #{tpu_custom_call.1} parent=11 // pred_region
          _
        $region36: #{tpu_custom_call.1} parent=11 // pred_fallthru
          _
        // Predicated region
        $region37: #{tpu_custom_call.1} parent=11 // pred_check
          %p319 = pneg %p197
        $region38: #{tpu_custom_call.1} parent=11 // pred_check_branch
          %321 = sbr.rel (%p319) target = $region40
        $region39: #{tpu_custom_call.1} parent=11 // pred_region
          %323 = vsyncadd [#allocation12], 0
          %s324 = sshll.u32 %s7, 4
          %s325 = int_to_ptr.hbm [resolvable:$true] %s324
          %s326 = sshll.u32 [#allocation11], 4
          %s327 = int_to_ptr.vmem [resolvable:$true] %s326
          %332 = dma.hbm_to_vmem [thread:$0]  %s325, 2048, %s327, [#allocation12], 128, 128, 8
        $region40: #{tpu_custom_call.1} parent=11 // pred_fallthru
          _
        // Predicated region
        $region41: #{tpu_custom_call.1} parent=11 // pred_check
          %p333 = pneg %p218
        $region42: #{tpu_custom_call.1} parent=11 // pred_check_branch
          %335 = sbr.rel (%p333) target = $region44
        $region43: #{tpu_custom_call.1} parent=11 // pred_region
          _
        $region44: #{tpu_custom_call.1} parent=11 // pred_fallthru
          _
      $region12: #{tpu_custom_call.1} parent=5 // pred_fallthru
        _
      %p336 = scmp.lt.s32.totalorder %s24, 2
      // Predicated region
      $region45: #{tpu_custom_call.1} parent=5 // pred_check
        %p337 = pneg %p336
      $region46: #{tpu_custom_call.1} parent=5 // pred_check_branch
        %339 = sbr.rel (%p337) target = $region48
      $region47: #{tpu_custom_call.1} parent=5 // pred_region
        // Predicated region
        $region49: #{tpu_custom_call.1} parent=47 // pred_check
          %p340 = pneg %p44
        $region50: #{tpu_custom_call.1} parent=47 // pred_check_branch
          %342 = sbr.rel (%p340) target = $region52
        $region51: #{tpu_custom_call.1} parent=47 // pred_region
          %s343 = sand.u32 %s34, 1
          %s344 = scalar_lea.sflag [#allocation3], %s343
          %s345 = sand.u32 %s34, 1
          %s346 = smul.addr %s345, 16
          %s347 = scalar_lea.vmem [#allocation2], %s346
          %s348 = smul.u32 2, %s24
          %350 = vsyncadd %s344, 0
          %s351 = smul.addr %s348, 2
          %s352 = smul.addr %s351, 4
          %s353 = scalar_lea.hbm %s0, %s352
          %s354 = sshll.u32 %s353, 4
          %s355 = int_to_ptr.hbm [resolvable:$true] %s354
          %s356 = sshll.u32 %s347, 4
          %s357 = int_to_ptr.vmem [resolvable:$true] %s356
          %362 = dma.hbm_to_vmem [thread:$0]  %s355, 256, %s357, %s344, 128, 128, 8
        $region52: #{tpu_custom_call.1} parent=47 // pred_fallthru
          _
      $region48: #{tpu_custom_call.1} parent=5 // pred_fallthru
        _
      %p363 = scmp.le.s32.totalorder 1, %s24
      %p364 = scmp.lt.s32.totalorder %s24, 3
      %p365 = pnand %p363, %p364
      %p366 = pneg %p365
      // Predicated region
      $region53: #{tpu_custom_call.1} parent=5 // pred_check
        _
      $region54: #{tpu_custom_call.1} parent=5 // pred_check_branch
        %368 = sbr.rel (%p365) target = $region56
      $region55: #{tpu_custom_call.1} parent=5 // pred_region
        %s369 = ssub.s32 %s24, 1
        %s370 = sand.u32 %s37, 1
        %s371 = scalar_lea.sflag [#allocation3], %s370
        %s372 = sand.u32 %s37, 1
        %s373 = smul.addr %s372, 16
        %s374 = scalar_lea.vmem [#allocation2], %s373
        // Predicated region
        $region57: #{tpu_custom_call.1} parent=55 // pred_check
          %p375 = pneg %p50
        $region58: #{tpu_custom_call.1} parent=55 // pred_check_branch
          %377 = sbr.rel (%p375) target = $region60
        $region59: #{tpu_custom_call.1} parent=55 // pred_region
          %379 = dma.done %s371, 256
        $region60: #{tpu_custom_call.1} parent=55 // pred_fallthru
          _
        // Predicated region
        $region61: #{tpu_custom_call.1} parent=55 // pred_check
          %p380 = pneg %p71
        $region62: #{tpu_custom_call.1} parent=55 // pred_check_branch
          %382 = sbr.rel (%p380) target = $region64
        $region63: #{tpu_custom_call.1} parent=55 // pred_region
          %384 = dma.done [#allocation6], 2048
        $region64: #{tpu_custom_call.1} parent=55 // pred_fallthru
          _
        // Predicated region
        $region65: #{tpu_custom_call.1} parent=55 // pred_check
          %p385 = pneg %p113
        $region66: #{tpu_custom_call.1} parent=55 // pred_check_branch
          %387 = sbr.rel (%p385) target = $region68
        $region67: #{tpu_custom_call.1} parent=55 // pred_region
          %389 = dma.done [#allocation6], 1024
        $region68: #{tpu_custom_call.1} parent=55 // pred_fallthru
          _
        // Predicated region
        $region69: #{tpu_custom_call.1} parent=55 // pred_check
          %p390 = pneg %p134
        $region70: #{tpu_custom_call.1} parent=55 // pred_check_branch
          %392 = sbr.rel (%p390) target = $region72
        $region71: #{tpu_custom_call.1} parent=55 // pred_region
          %394 = dma.done [#allocation9], 16
        $region72: #{tpu_custom_call.1} parent=55 // pred_fallthru
          _
        // Predicated region
        $region73: #{tpu_custom_call.1} parent=55 // pred_check
          %p395 = pneg %p155
        $region74: #{tpu_custom_call.1} parent=55 // pred_check_branch
          %397 = sbr.rel (%p395) target = $region76
        $region75: #{tpu_custom_call.1} parent=55 // pred_region
          %399 = dma.done [#allocation9], 1024
        $region76: #{tpu_custom_call.1} parent=55 // pred_fallthru
          _
        // Predicated region
        $region77: #{tpu_custom_call.1} parent=55 // pred_check
          %p400 = pneg %p197
        $region78: #{tpu_custom_call.1} parent=55 // pred_check_branch
          %402 = sbr.rel (%p400) target = $region80
        $region79: #{tpu_custom_call.1} parent=55 // pred_region
          %404 = dma.done [#allocation12], 2048
        $region80: #{tpu_custom_call.1} parent=55 // pred_fallthru
          _
        %s405 = sand.u32 %s37, 1
        %s406 = scalar_lea.sflag [#allocation3], %s405
        %s407 = sand.u32 %s37, 1
        %s408 = smul.addr %s407, 16
        %s409 = scalar_lea.vmem [#allocation2], %s408
        %p410 = pneg %p50
        %p411 = pneg %p47
        %p412 = pneg %p71
        %p413 = pneg %p68
        %p414 = pneg %p92
        %p415 = pneg %p89
        %p416 = pneg %p113
        %p417 = pneg %p110
        %p418 = pneg %p134
        %p419 = pneg %p131
        %p420 = pneg %p155
        %p421 = pneg %p152
        %p422 = pneg %p176
        %p423 = pneg %p173
        %p424 = pneg %p197
        %p425 = pneg %p194
        %p426 = pneg %p218
        %p427 = pneg %p215
        %p428 = pneg %p244
        %p429 = pneg %p241
        %s430 = sand.u32 %s231, 1
        %s431 = scalar_lea.sflag [#allocation4], %s430
        %s432 = sand.u32 %s231, 1
        %s433 = smul.addr %s432, 32
        %s434 = scalar_lea.vmem [#allocation13], %s433
        %s435 = smul.u32 2, %s29
        %s436 = smul.u32 2, %s29
        %v437 = vld [vmem:[%s374] sm:$0xff]
        %v438 = vld [vmem:[%s374 + $0x8] sm:$0xff]
        %v439 = vld [vmem:[#allocation5] sm:$0xf]
        %v440 = vld [vmem:[#allocation5 + $0x4] sm:$0xf]
        %v441 = vld [vmem:[#allocation5 + $0x8] sm:$0xf]
        %v442 = vld [vmem:[#allocation5 + $0xc] sm:$0xf]
        %v443 = vld [vmem:[#allocation5 + $0x10] sm:$0xf]
        %v444 = vld [vmem:[#allocation5 + $0x14] sm:$0xf]
        %v445 = vld [vmem:[#allocation5 + $0x18] sm:$0xf]
        %v446 = vld [vmem:[#allocation5 + $0x1c] sm:$0xf]
        %v447 = vld [vmem:[#allocation5 + $0x20] sm:$0xf]
        %v448 = vld [vmem:[#allocation5 + $0x24] sm:$0xf]
        %v449 = vld [vmem:[#allocation5 + $0x28] sm:$0xf]
        %v450 = vld [vmem:[#allocation5 + $0x2c] sm:$0xf]
        %v451 = vld [vmem:[#allocation5 + $0x30] sm:$0xf]
        %v452 = vld [vmem:[#allocation5 + $0x34] sm:$0xf]
        %v453 = vld [vmem:[#allocation5 + $0x38] sm:$0xf]
        %v454 = vld [vmem:[#allocation5 + $0x3c] sm:$0xf]
        %v455 = vld [vmem:[#allocation5 + $0x40] sm:$0xf]
        %v456 = vld [vmem:[#allocation5 + $0x44] sm:$0xf]
        %v457 = vld [vmem:[#allocation5 + $0x48] sm:$0xf]
        %v458 = vld [vmem:[#allocation5 + $0x4c] sm:$0xf]
        %v459 = vld [vmem:[#allocation5 + $0x50] sm:$0xf]
        %v460 = vld [vmem:[#allocation5 + $0x54] sm:$0xf]
        %v461 = vld [vmem:[#allocation5 + $0x58] sm:$0xf]
        %v462 = vld [vmem:[#allocation5 + $0x5c] sm:$0xf]
        %v463 = vld [vmem:[#allocation5 + $0x60] sm:$0xf]
        %v464 = vld [vmem:[#allocation5 + $0x64] sm:$0xf]
        %v465 = vld [vmem:[#allocation5 + $0x68] sm:$0xf]
        %v466 = vld [vmem:[#allocation5 + $0x6c] sm:$0xf]
        %v467 = vld [vmem:[#allocation5 + $0x70] sm:$0xf]
        %v468 = vld [vmem:[#allocation5 + $0x74] sm:$0xf]
        %v469 = vld [vmem:[#allocation5 + $0x78] sm:$0xf]
        %v470 = vld [vmem:[#allocation5 + $0x7c] sm:$0xf]
        %v471 = vld [vmem:[%s2] sm:$0x1]
        %v473 = vperm.slane %v471, 0
        %v477 = vunpack.c.l.b16 %v437
        %v478 = vunpack.c.h.b16 %v437
        %v479 = vunpack.c.l.b16 %v438
        %v480 = vunpack.c.h.b16 %v438
        %v481 = vpack.c.b16 %v479, %v477
        %v482 = vpack.c.b16 %v480, %v478
        %v517 = vunpack.c.l.b16 %v439
        %v518 = vunpack.c.l.b16 %v440
        %v519 = vunpack.c.l.b16 %v441
        %v520 = vunpack.c.l.b16 %v442
        %v521 = vunpack.c.l.b16 %v443
        %v522 = vunpack.c.l.b16 %v444
        %v523 = vunpack.c.l.b16 %v445
        %v524 = vunpack.c.l.b16 %v446
        %v525 = vunpack.c.l.b16 %v447
        %v526 = vunpack.c.l.b16 %v448
        %v527 = vunpack.c.l.b16 %v449
        %v528 = vunpack.c.l.b16 %v450
        %v529 = vunpack.c.l.b16 %v451
        %v530 = vunpack.c.l.b16 %v452
        %v531 = vunpack.c.l.b16 %v453
        %v532 = vunpack.c.l.b16 %v454
        %v533 = vunpack.c.l.b16 %v455
        %v534 = vunpack.c.l.b16 %v456
        %v535 = vunpack.c.l.b16 %v457
        %v536 = vunpack.c.l.b16 %v458
        %v537 = vunpack.c.l.b16 %v459
        %v538 = vunpack.c.l.b16 %v460
        %v539 = vunpack.c.l.b16 %v461
        %v540 = vunpack.c.l.b16 %v462
        %v541 = vunpack.c.l.b16 %v463
        %v542 = vunpack.c.l.b16 %v464
        %v543 = vunpack.c.l.b16 %v465
        %v544 = vunpack.c.l.b16 %v466
        %v545 = vunpack.c.l.b16 %v467
        %v546 = vunpack.c.l.b16 %v468
        %v547 = vunpack.c.l.b16 %v469
        %v548 = vunpack.c.l.b16 %v470
        %v549 = vpack.c.b16 %v518, %v517
        %v550 = vpack.c.b16 %v520, %v519
        %v551 = vpack.c.b16 %v522, %v521
        %v552 = vpack.c.b16 %v524, %v523
        %v553 = vpack.c.b16 %v526, %v525
        %v554 = vpack.c.b16 %v528, %v527
        %v555 = vpack.c.b16 %v530, %v529
        %v556 = vpack.c.b16 %v532, %v531
        %v557 = vpack.c.b16 %v534, %v533
        %v558 = vpack.c.b16 %v536, %v535
        %v559 = vpack.c.b16 %v538, %v537
        %v560 = vpack.c.b16 %v540, %v539
        %v561 = vpack.c.b16 %v542, %v541
        %v562 = vpack.c.b16 %v544, %v543
        %v563 = vpack.c.b16 %v546, %v545
        %v564 = vpack.c.b16 %v548, %v547
        %581 = vmatpush.bf16.msra.mxu0 %v556
        %582 = vmatpush.bf16.msra.mxu0 %v555
        %583 = vmatpush.bf16.msra.mxu0 %v554
        %584 = vmatpush.bf16.msra.mxu0 %v553
        %585 = vmatpush.bf16.msra.mxu0 %v552
        %586 = vmatpush.bf16.msra.mxu0 %v551
        %587 = vmatpush.bf16.msra.mxu0 %v550
        %588 = vmatpush.bf16.msra.mxu0 %v549
        %589 = vmatmul.bf16.gmra.mxu0 %v481
        %v590 = vpop.f32.mrf.mxu0
        %v591 = vadd.f32 %v473, %v590
        %v592 = vpop.f32.mrf.mxu0
        %v593 = vadd.f32 %v473, %v592
        %594 = vdwg.mxu0
        %595 = vmatpush.bf16.msra.mxu0 %v564
        %596 = vmatpush.bf16.msra.mxu0 %v563
        %597 = vmatpush.bf16.msra.mxu0 %v562
        %598 = vmatpush.bf16.msra.mxu0 %v561
        %599 = vmatpush.bf16.msra.mxu0 %v560
        %600 = vmatpush.bf16.msra.mxu0 %v559
        %601 = vmatpush.bf16.msra.mxu0 %v558
        %602 = vmatpush.bf16.msra.mxu0 %v557
        %603 = vmatmul.bf16.gmra.mxu0 %v482
        %v604 = vpop.f32.mrf.mxu0
        %v605 = vadd.f32 %v591, %v604
        %v606 = vpop.f32.mrf.mxu0
        %v607 = vadd.f32 %v593, %v606
        %608 = vdwg.mxu0
        %v609 = vmax.f32 %v605, 0.0
        %v610 = vmax.f32 %v607, 0.0
        %v611 = vpack.c.bf16 %v610, %v609
        %v612 = vld [vmem:[#allocation7] sm:$0xf]
        %v613 = vld [vmem:[#allocation7 + $0x4] sm:$0xf]
        %v614 = vld [vmem:[#allocation7 + $0x8] sm:$0xf]
        %v615 = vld [vmem:[#allocation7 + $0xc] sm:$0xf]
        %v616 = vld [vmem:[#allocation7 + $0x10] sm:$0xf]
        %v617 = vld [vmem:[#allocation7 + $0x14] sm:$0xf]
        %v618 = vld [vmem:[#allocation7 + $0x18] sm:$0xf]
        %v619 = vld [vmem:[#allocation7 + $0x1c] sm:$0xf]
        %v620 = vld [vmem:[#allocation7 + $0x20] sm:$0xf]
        %v621 = vld [vmem:[#allocation7 + $0x24] sm:$0xf]
        %v622 = vld [vmem:[#allocation7 + $0x28] sm:$0xf]
        %v623 = vld [vmem:[#allocation7 + $0x2c] sm:$0xf]
        %v624 = vld [vmem:[#allocation7 + $0x30] sm:$0xf]
        %v625 = vld [vmem:[#allocation7 + $0x34] sm:$0xf]
        %v626 = vld [vmem:[#allocation7 + $0x38] sm:$0xf]
        %v627 = vld [vmem:[#allocation7 + $0x3c] sm:$0xf]
        %v628 = vld [vmem:[#allocation8] sm:$0x1]
        %v630 = vperm.slane %v628, 0
        %v648 = vunpack.c.l.b16 %v612
        %v649 = vunpack.c.l.b16 %v613
        %v650 = vunpack.c.l.b16 %v614
        %v651 = vunpack.c.l.b16 %v615
        %v652 = vunpack.c.l.b16 %v616
        %v653 = vunpack.c.l.b16 %v617
        %v654 = vunpack.c.l.b16 %v618
        %v655 = vunpack.c.l.b16 %v619
        %v656 = vunpack.c.l.b16 %v620
        %v657 = vunpack.c.l.b16 %v621
        %v658 = vunpack.c.l.b16 %v622
        %v659 = vunpack.c.l.b16 %v623
        %v660 = vunpack.c.l.b16 %v624
        %v661 = vunpack.c.l.b16 %v625
        %v662 = vunpack.c.l.b16 %v626
        %v663 = vunpack.c.l.b16 %v627
        %v664 = vpack.c.b16 %v649, %v648
        %v665 = vpack.c.b16 %v651, %v650
        %v666 = vpack.c.b16 %v653, %v652
        %v667 = vpack.c.b16 %v655, %v654
        %v668 = vpack.c.b16 %v657, %v656
        %v669 = vpack.c.b16 %v659, %v658
        %v670 = vpack.c.b16 %v661, %v660
        %v671 = vpack.c.b16 %v663, %v662
        %680 = vmatpush.bf16.msra.mxu0 %v671
        %681 = vmatpush.bf16.msra.mxu0 %v670
        %682 = vmatpush.bf16.msra.mxu0 %v669
        %683 = vmatpush.bf16.msra.mxu0 %v668
        %684 = vmatpush.bf16.msra.mxu0 %v667
        %685 = vmatpush.bf16.msra.mxu0 %v666
        %686 = vmatpush.bf16.msra.mxu0 %v665
        %687 = vmatpush.bf16.msra.mxu0 %v664
        %688 = vmatmul.bf16.gmra.mxu0 %v611
        %v689 = vpop.f32.mrf.mxu0
        %v690 = vadd.f32 %v630, %v689
        %v691 = vpop.f32.mrf.mxu0
        %v692 = vadd.f32 %v630, %v691
        %693 = vdwg.mxu0
        %v694 = vmax.f32 %v690, 0.0
        %v695 = vmax.f32 %v692, 0.0
        %v696 = vpack.c.bf16 %v695, %v694
        %v697 = vld [vmem:[#allocation10] sm:$0xf]
        %v698 = vld [vmem:[#allocation10 + $0x4] sm:$0xf]
        %v699 = vld [vmem:[#allocation10 + $0x8] sm:$0xf]
        %v700 = vld [vmem:[#allocation10 + $0xc] sm:$0xf]
        %v701 = vld [vmem:[#allocation10 + $0x10] sm:$0xf]
        %v702 = vld [vmem:[#allocation10 + $0x14] sm:$0xf]
        %v703 = vld [vmem:[#allocation10 + $0x18] sm:$0xf]
        %v704 = vld [vmem:[#allocation10 + $0x1c] sm:$0xf]
        %v705 = vld [vmem:[#allocation10 + $0x20] sm:$0xf]
        %v706 = vld [vmem:[#allocation10 + $0x24] sm:$0xf]
        %v707 = vld [vmem:[#allocation10 + $0x28] sm:$0xf]
        %v708 = vld [vmem:[#allocation10 + $0x2c] sm:$0xf]
        %v709 = vld [vmem:[#allocation10 + $0x30] sm:$0xf]
        %v710 = vld [vmem:[#allocation10 + $0x34] sm:$0xf]
        %v711 = vld [vmem:[#allocation10 + $0x38] sm:$0xf]
        %v712 = vld [vmem:[#allocation10 + $0x3c] sm:$0xf]
        %v713 = vld [vmem:[%s6] sm:$0x1]
        %v715 = vperm.slane %v713, 0
        %v733 = vunpack.c.l.b16 %v697
        %v734 = vunpack.c.l.b16 %v698
        %v735 = vunpack.c.l.b16 %v699
        %v736 = vunpack.c.l.b16 %v700
        %v737 = vunpack.c.l.b16 %v701
        %v738 = vunpack.c.l.b16 %v702
        %v739 = vunpack.c.l.b16 %v703
        %v740 = vunpack.c.l.b16 %v704
        %v741 = vunpack.c.l.b16 %v705
        %v742 = vunpack.c.l.b16 %v706
        %v743 = vunpack.c.l.b16 %v707
        %v744 = vunpack.c.l.b16 %v708
        %v745 = vunpack.c.l.b16 %v709
        %v746 = vunpack.c.l.b16 %v710
        %v747 = vunpack.c.l.b16 %v711
        %v748 = vunpack.c.l.b16 %v712
        %v749 = vpack.c.b16 %v734, %v733
        %v750 = vpack.c.b16 %v736, %v735
        %v751 = vpack.c.b16 %v738, %v737
        %v752 = vpack.c.b16 %v740, %v739
        %v753 = vpack.c.b16 %v742, %v741
        %v754 = vpack.c.b16 %v744, %v743
        %v755 = vpack.c.b16 %v746, %v745
        %v756 = vpack.c.b16 %v748, %v747
        %765 = vmatpush.bf16.msra.mxu0 %v756
        %766 = vmatpush.bf16.msra.mxu0 %v755
        %767 = vmatpush.bf16.msra.mxu0 %v754
        %768 = vmatpush.bf16.msra.mxu0 %v753
        %769 = vmatpush.bf16.msra.mxu0 %v752
        %770 = vmatpush.bf16.msra.mxu0 %v751
        %771 = vmatpush.bf16.msra.mxu0 %v750
        %772 = vmatpush.bf16.msra.mxu0 %v749
        %773 = vmatmul.bf16.gmra.mxu0 %v696
        %v774 = vpop.f32.mrf.mxu0
        %v775 = vadd.f32 %v715, %v774
        %v776 = vpop.f32.mrf.mxu0
        %v777 = vadd.f32 %v715, %v776
        %778 = vdwg.mxu0
        %v779 = vmax.f32 %v775, 0.0
        %v780 = vmax.f32 %v777, 0.0
        %v781 = vpack.c.bf16 %v780, %v779
        %v782 = vld [vmem:[#allocation11] sm:$0xff]
        %v783 = vld [vmem:[#allocation11 + $0x8] sm:$0xff]
        %v784 = vld [vmem:[#allocation11 + $0x10] sm:$0xff]
        %v785 = vld [vmem:[#allocation11 + $0x18] sm:$0xff]
        %v786 = vld [vmem:[#allocation11 + $0x20] sm:$0xff]
        %v787 = vld [vmem:[#allocation11 + $0x28] sm:$0xff]
        %v788 = vld [vmem:[#allocation11 + $0x30] sm:$0xff]
        %v789 = vld [vmem:[#allocation11 + $0x38] sm:$0xff]
        %v790 = vld [vmem:[#allocation11 + $0x40] sm:$0xff]
        %v791 = vld [vmem:[#allocation11 + $0x48] sm:$0xff]
        %v792 = vld [vmem:[#allocation11 + $0x50] sm:$0xff]
        %v793 = vld [vmem:[#allocation11 + $0x58] sm:$0xff]
        %v794 = vld [vmem:[#allocation11 + $0x60] sm:$0xff]
        %v795 = vld [vmem:[#allocation11 + $0x68] sm:$0xff]
        %v796 = vld [vmem:[#allocation11 + $0x70] sm:$0xff]
        %v797 = vld [vmem:[#allocation11 + $0x78] sm:$0xff]
        %v798 = vld [vmem:[%s8] sm:$0x3]
        %v800 = vperm.slane %v798, 0
        %v801 = vperm.slane %v798, 1
        %v820 = vunpack.c.l.b16 %v782
        %v821 = vunpack.c.h.b16 %v782
        %v822 = vunpack.c.l.b16 %v783
        %v823 = vunpack.c.h.b16 %v783
        %v824 = vunpack.c.l.b16 %v784
        %v825 = vunpack.c.h.b16 %v784
        %v826 = vunpack.c.l.b16 %v785
        %v827 = vunpack.c.h.b16 %v785
        %v828 = vunpack.c.l.b16 %v786
        %v829 = vunpack.c.h.b16 %v786
        %v830 = vunpack.c.l.b16 %v787
        %v831 = vunpack.c.h.b16 %v787
        %v832 = vunpack.c.l.b16 %v788
        %v833 = vunpack.c.h.b16 %v788
        %v834 = vunpack.c.l.b16 %v789
        %v835 = vunpack.c.h.b16 %v789
        %v836 = vunpack.c.l.b16 %v790
        %v837 = vunpack.c.h.b16 %v790
        %v838 = vunpack.c.l.b16 %v791
        %v839 = vunpack.c.h.b16 %v791
        %v840 = vunpack.c.l.b16 %v792
        %v841 = vunpack.c.h.b16 %v792
        %v842 = vunpack.c.l.b16 %v793
        %v843 = vunpack.c.h.b16 %v793
        %v844 = vunpack.c.l.b16 %v794
        %v845 = vunpack.c.h.b16 %v794
        %v846 = vunpack.c.l.b16 %v795
        %v847 = vunpack.c.h.b16 %v795
        %v848 = vunpack.c.l.b16 %v796
        %v849 = vunpack.c.h.b16 %v796
        %v850 = vunpack.c.l.b16 %v797
        %v851 = vunpack.c.h.b16 %v797
        %v852 = vpack.c.b16 %v822, %v820
        %v853 = vpack.c.b16 %v823, %v821
        %v854 = vpack.c.b16 %v826, %v824
        %v855 = vpack.c.b16 %v827, %v825
        %v856 = vpack.c.b16 %v830, %v828
        %v857 = vpack.c.b16 %v831, %v829
        %v858 = vpack.c.b16 %v834, %v832
        %v859 = vpack.c.b16 %v835, %v833
        %v860 = vpack.c.b16 %v838, %v836
        %v861 = vpack.c.b16 %v839, %v837
        %v862 = vpack.c.b16 %v842, %v840
        %v863 = vpack.c.b16 %v843, %v841
        %v864 = vpack.c.b16 %v846, %v844
        %v865 = vpack.c.b16 %v847, %v845
        %v866 = vpack.c.b16 %v850, %v848
        %v867 = vpack.c.b16 %v851, %v849
        %884 = vmatpush.bf16.msra.mxu0 %v866
        %885 = vmatpush.bf16.msra.mxu0 %v864
        %886 = vmatpush.bf16.msra.mxu0 %v862
        %887 = vmatpush.bf16.msra.mxu0 %v860
        %888 = vmatpush.bf16.msra.mxu0 %v858
        %889 = vmatpush.bf16.msra.mxu0 %v856
        %890 = vmatpush.bf16.msra.mxu0 %v854
        %891 = vmatpush.bf16.msra.mxu0 %v852
        %892 = vmatmul.bf16.gmra.mxu0 %v781
        %v893 = vpop.f32.mrf.mxu0
        %v894 = vadd.f32 %v800, %v893
        %v895 = vpop.f32.mrf.mxu0
        %v896 = vadd.f32 %v800, %v895
        %897 = vdwg.mxu0
        %898 = vmatpush.bf16.msra.mxu0 %v867
        %899 = vmatpush.bf16.msra.mxu0 %v865
        %900 = vmatpush.bf16.msra.mxu0 %v863
        %901 = vmatpush.bf16.msra.mxu0 %v861
        %902 = vmatpush.bf16.msra.mxu0 %v859
        %903 = vmatpush.bf16.msra.mxu0 %v857
        %904 = vmatpush.bf16.msra.mxu0 %v855
        %905 = vmatpush.bf16.msra.mxu0 %v853
        %906 = vmatmul.bf16.gmra.mxu0 %v781
        %v907 = vpop.f32.mrf.mxu0
        %v908 = vadd.f32 %v801, %v907
        %v909 = vpop.f32.mrf.mxu0
        %v910 = vadd.f32 %v801, %v909
        %911 = vdwg.mxu0
        %v912 = vmax.f32 %v894, 0.0
        %v913 = vmax.f32 %v908, 0.0
        %v914 = vmax.f32 %v896, 0.0
        %v915 = vmax.f32 %v910, 0.0
        %916 = vst [vmem:[%s434] sm:$0xff] %v912
        %917 = vst [vmem:[%s434 + $0x8] sm:$0xff] %v913
        %918 = vst [vmem:[%s434 + $0x10] sm:$0xff] %v914
        %919 = vst [vmem:[%s434 + $0x18] sm:$0xff] %v915
        %s920 = sand.u32 %s231, 1
        %s921 = scalar_lea.sflag [#allocation4], %s920
        %s922 = sand.u32 %s231, 1
        %s923 = smul.addr %s922, 32
        %s924 = scalar_lea.vmem [#allocation13], %s923
        // Predicated region
        $region81: #{tpu_custom_call.1} parent=55 // pred_check
          %p925 = pneg %p241
        $region82: #{tpu_custom_call.1} parent=55 // pred_check_branch
          %927 = sbr.rel (%p925) target = $region84
        $region83: #{tpu_custom_call.1} parent=55 // pred_region
          %s928 = smul.u32 2, %s29
          %930 = vsyncadd %s921, 0
          %s931 = smul.addr %s928, 2
          %s932 = smul.addr %s931, 8
          %s933 = scalar_lea.hbm %s9, %s932
          %s934 = sshll.u32 %s924, 4
          %s935 = int_to_ptr.vmem [resolvable:$true] %s934
          %s936 = sshll.u32 %s933, 4
          %s937 = int_to_ptr.hbm [resolvable:$true] %s936
          %942 = dma.vmem_to_hbm [thread:$0]  %s935, 512, %s937, %s921, 256, 256, 16
        $region84: #{tpu_custom_call.1} parent=55 // pred_fallthru
          _
      $region56: #{tpu_custom_call.1} parent=5 // pred_fallthru
        _
      %p943 = scmp.le.s32.totalorder 2, %s24
      // Predicated region
      $region85: #{tpu_custom_call.1} parent=5 // pred_check
        %p944 = pneg %p943
      $region86: #{tpu_custom_call.1} parent=5 // pred_check_branch
        %946 = sbr.rel (%p944) target = $region88
      $region87: #{tpu_custom_call.1} parent=5 // pred_region
        %s947 = ssub.s32 %s24, 2
        // Predicated region
        $region89: #{tpu_custom_call.1} parent=87 // pred_check
          %p948 = pneg %p247
        $region90: #{tpu_custom_call.1} parent=87 // pred_check_branch
          %950 = sbr.rel (%p948) target = $region92
        $region91: #{tpu_custom_call.1} parent=87 // pred_region
          %s951 = sand.u32 %s232, 1
          %s952 = scalar_lea.sflag [#allocation4], %s951
          %s953 = sand.u32 %s232, 1
          %s954 = smul.addr %s953, 32
          %s955 = scalar_lea.vmem [#allocation13], %s954
          %957 = dma.done %s952, 512
        $region92: #{tpu_custom_call.1} parent=87 // pred_fallthru
          _
      $region88: #{tpu_custom_call.1} parent=5 // pred_fallthru
        _
    $region6: #{tpu_custom_call.1} parent=1 // loop_footer
      %s28 = sadd.s32 1, %s24
    $region7: #{tpu_custom_call.1} parent=1 // loop_footer_branch
      %23 = sbr.rel target = $region3
    $region8: #{tpu_custom_call.1} parent=1 // loop_exit
      _
    %958 = vsyncpa [#allocation3], 1
    %s959 = scalar_lea.sflag [#allocation3], 1
    %960 = vsyncpa %s959, 1
    %961 = vsyncpa [#allocation6], 1
    %962 = vsyncpa [#allocation9], 1
    %963 = vsyncpa [#allocation12], 1
    %964 = vsyncpa [#allocation4], 1
    %s965 = scalar_lea.sflag [#allocation4], 1
    %966 = vsyncpa %s965, 1

</llo_original>
